<compile_context>
chip_gen: v5e
topology: v5e:2x2
jax: 0.10.0
libtpu: 0.0.40
codegen_flags: <defaults>
</compile_context>

<pallas_src>
import jax
import jax.numpy as jnp
from jax.experimental import pallas as pl
from jax.experimental.pallas import tpu as pltpu


def _droppath_kernel(scale_ref, x_ref, o_ref):
    # scale_ref: VMEM (TN, 1) f32 per-sample scale (0 or 1/keep_prob)
    # x_ref/o_ref: VMEM (TN, TD) tiles in the activation dtype
    o_ref[...] = (x_ref[...].astype(jnp.float32) * scale_ref[...]).astype(o_ref.dtype)


def _droppath_residual_kernel(scale_ref, x_ref, res_ref, o_ref):
    # Fused residual add: out = residual + drop_path(x)
    o_ref[...] = (res_ref[...].astype(jnp.float32)
                  + x_ref[...].astype(jnp.float32) * scale_ref[...]
                  ).astype(o_ref.dtype)


def _round_up(a, m):
    return (a + m - 1) // m * m


def _choose_tiles(n, d, dtype, n_tensor_args):
    """Pick (TN, TD) for an (n, d) activation.

    TN: full-packed sublane batch tile (8/16/32 rows for 4/2/1-byte dtypes),
        or the full batch dim when n is smaller (always a legal block dim).
    TD: lane-dense multiple of 128, sized so all double-buffered tensor tiles
        stay around ~8 MiB resident (safe under v5e's 16 MiB scoped-VMEM
        default, and well under v6e/v7x limits).
    """
    itemsize = jnp.dtype(dtype).itemsize
    packing = max(1, 4 // itemsize)
    sub = 8 * packing
    tn = sub if n >= sub else n

    total_budget = 8 * 1024 * 1024
    per_tile = total_budget // (2 * n_tensor_args)       # 2x for double-buffering
    max_td = max(128, (per_tile // (tn * itemsize)) // 128 * 128)

    td = min(_round_up(d, 128), max_td)

    # v7x megacore: if the batch axis has a single block, make sure the
    # feature axis has >= 2 blocks so both TensorCores get work.
    if pl.cdiv(n, tn) == 1:
        while pl.cdiv(d, td) < 2 and td > 128:
            td = max(128, ((td // 2) // 128) * 128)
    return tn, td


def drop_path(x, drop_prob=0.0, *, training=True, key=None, residual=None):
    """Pallas DropPath.

    out = x / keep_prob * floor(keep_prob + U[0,1))  (per-sample mask, broadcast)
    If `residual` is provided, returns residual + drop_path(x) fused in one pass.
    """
    if drop_prob == 0.0 or not training:
        return x if residual is None else residual + x
    if key is None:
        raise ValueError(
            "drop_path with drop_prob > 0 in training mode requires an explicit "
            "PRNG key (a fixed default key would drop the same samples every step)."
        )
    keep_prob = 1.0 - float(drop_prob)

    n = x.shape[0]
    d = 1
    for s in x.shape[1:]:
        d *= s
    x2 = x.reshape(n, d)

    # Per-sample scale, precomputed once in the wrapper, kept in f32 so
    # low-precision activations don't see a rounded 1/keep_prob.
    rand = jax.random.uniform(key, (n,), dtype=jnp.float32)
    scale = (jnp.floor(keep_prob + rand) / keep_prob).reshape(n, 1)

    n_tensor_args = 2 if residual is None else 3
    tn, td = _choose_tiles(n, d, x.dtype, n_tensor_args)
    grid = (pl.cdiv(n, tn), pl.cdiv(d, td))

    scale_spec = pl.BlockSpec((tn, 1), lambda i, j: (i, 0))
    tile_spec = pl.BlockSpec((tn, td), lambda i, j: (i, j))

    if residual is None:
        kernel = _droppath_kernel
        operands = (scale, x2)
        in_specs = [scale_spec, tile_spec]
    else:
        assert residual.shape == x.shape and residual.dtype == x.dtype
        kernel = _droppath_residual_kernel
        operands = (scale, x2, residual.reshape(n, d))
        in_specs = [scale_spec, tile_spec, tile_spec]

    out2 = pl.pallas_call(
        kernel,
        out_shape=jax.ShapeDtypeStruct((n, d), x.dtype),
        grid=grid,
        in_specs=in_specs,
        out_specs=tile_spec,
        compiler_params=pltpu.CompilerParams(
            dimension_semantics=("parallel", "parallel")),
    )(*operands)

    return out2.reshape(x.shape)


if __name__ == "__main__":
    key = jax.random.PRNGKey(0)
    kx, kres, kmask = jax.random.split(key, 3)

    drop_prob = 0.3
    keep_prob = 1.0 - drop_prob

    # --- f32, ConvNeXt-style NCHW block input ---
    x = jax.random.normal(kx, (2, 4, 16, 16), dtype=jnp.float32)
    out = jax.block_until_ready(drop_path(x, drop_prob, training=True, key=kmask))

    rand = jax.random.uniform(kmask, (2,), dtype=jnp.float32)
    mask = jnp.floor(keep_prob + rand).reshape(2, 1, 1, 1)
    ref = x / keep_prob * mask
    assert out.shape == x.shape and out.dtype == x.dtype
    assert jnp.allclose(out, ref, atol=1e-5, rtol=1e-5)

    # --- fused residual path: residual + drop_path(x) in one HBM pass ---
    res = jax.random.normal(kres, x.shape, dtype=jnp.float32)
    out_fused = jax.block_until_ready(
        drop_path(x, drop_prob, training=True, key=kmask, residual=res))
    assert jnp.allclose(out_fused, res + ref, atol=1e-5, rtol=1e-5)

    # --- bf16, non-128-aligned feature dim, batch not multiple of 8 (partial blocks) ---
    xb = jax.random.normal(kx, (5, 3, 7, 9), dtype=jnp.bfloat16)
    out_b = jax.block_until_ready(drop_path(xb, drop_prob, training=True, key=kmask))
    rand_b = jax.random.uniform(kmask, (5,), dtype=jnp.float32)
    mask_b = jnp.floor(keep_prob + rand_b).reshape(5, 1, 1, 1)
    ref_b = (xb.astype(jnp.float32) / keep_prob * mask_b).astype(jnp.bfloat16)
    assert out_b.shape == xb.shape and out_b.dtype == xb.dtype
    assert jnp.allclose(out_b.astype(jnp.float32), ref_b.astype(jnp.float32),
                        atol=1e-2, rtol=2e-2)

    # --- inference / drop_prob == 0 path: identity ---
    out_eval = jax.block_until_ready(drop_path(x, drop_prob, training=False))
    assert jnp.allclose(out_eval, x)

    print("KERNEL_OK")
</pallas_src>

<mosaic_0001>
module attributes {stable_mosaic.version = 11 : i64} {
  func.func @_droppath_kernel(%arg0: i32, %arg1: i32, %arg2: memref<2x1xf32, #tpu.memory_space<vmem>>, %arg3: memref<2x512xf32, #tpu.memory_space<vmem>>, %arg4: memref<2x512xf32, #tpu.memory_space<vmem>>) attributes {dimension_semantics = [#tpu.dimension_semantics<parallel>, #tpu.dimension_semantics<parallel>], iteration_bounds = array<i64: 1, 2>, scalar_prefetch = 0 : i64, scratch_operands = 0 : i64, tpu.core_type = #tpu.core_type<tc>, window_params = [{transform_indices = @transform_0, window_bounds = array<i64: 2, 1>}, {transform_indices = @transform_1, window_bounds = array<i64: 2, 512>}, {transform_indices = @transform_2, window_bounds = array<i64: 2, 512>}]} {
    %c0 = arith.constant 0 : index
    %c0_0 = arith.constant 0 : index
    %0 = vector.load %arg3[%c0, %c0_0] : memref<2x512xf32, #tpu.memory_space<vmem>>, vector<2x512xf32>
    %c0_1 = arith.constant 0 : index
    %c0_2 = arith.constant 0 : index
    %1 = vector.load %arg2[%c0_1, %c0_2] : memref<2x1xf32, #tpu.memory_space<vmem>>, vector<2x1xf32>
    %2 = vector.broadcast %1 : vector<2x1xf32> to vector<2x512xf32>
    %3 = arith.mulf %0, %2 : vector<2x512xf32>
    %c0_3 = arith.constant 0 : index
    %c0_4 = arith.constant 0 : index
    %4 = vector.load %arg4[%c0_3, %c0_4] : memref<2x512xf32, #tpu.memory_space<vmem>>, vector<2x512xf32>
    tpu.vector_store %arg4[%c0_3, %c0_4], %3 {strides = array<i32>} : memref<2x512xf32, #tpu.memory_space<vmem>>, vector<2x512xf32>,
    return
  }
  func.func @transform_0(%arg0: i32, %arg1: i32) -> (i32, i32) {
    %c0_i32 = arith.constant 0 : i32
    %c0_i32_0 = arith.constant 0 : i32
    return %arg0, %c0_i32 : i32, i32
  }
  func.func @transform_1(%arg0: i32, %arg1: i32) -> (i32, i32) {
    %c0_i32 = arith.constant 0 : i32
    return %arg0, %arg1 : i32, i32
  }
  func.func @transform_2(%arg0: i32, %arg1: i32) -> (i32, i32) {
    %c0_i32 = arith.constant 0 : i32
    return %arg0, %arg1 : i32, i32
  }
}

</mosaic_0001>

<llo_original>
// kernel: tpu_custom_call.1
$region0: #{tpu_custom_call.1}
  #allocation0 [shape = 'u32[]', space=smem, size = 0x4, offset = 0x4, fixed_abs, tag = 'smem constant byte address 0x4 - core index']
  #allocation1 [shape = 'u32[72,128]{1,0:T(1,128)}', space=vmem, size = 0x9000, scoped, tag = 'internal scratch']
  %s0 = inlined_call_operand.vmem [shape: f32[2,1], index: 0, kind: input, shape index: {}]
  %s1 = inlined_call_operand.hbm [shape: f32[2,1024], index: 1, kind: input, shape index: {}]
  %s2 = inlined_call_operand.hbm [shape: f32[2,1024], index: 2, kind: output, shape index: {}]
  %s3 = sld [smem:[#allocation0]]
  $region45: #{tpu_custom_call.1} parent=0
    _
  %s5 = ssub.s32 1, %s3
  %s6 = scalar_select 0, %s5, %s3
  $region1: #{tpu_custom_call.1} parent=0
    #allocation2 [shape = 'u8[8192]{0}', space=vmem, size = 0x2000, scoped, tag = 'input window, operand 1']
    #allocation3 [shape = 's32[2]{0}', space=sflag, size = 0x8, scoped, tag = 'scoped memory for tpu_custom_call.1']
    #allocation4 [shape = 's32[2]{0}', space=sflag, size = 0x8, scoped, tag = 'scoped memory for tpu_custom_call.1']
    #allocation5 [shape = 'u8[8192]{0}', space=vmem, size = 0x2000, scoped, tag = 'output window, operand 0']
    %7 = vsyncpa [#allocation3], 0
    %s8 = scalar_lea.sflag [#allocation3], 1
    %9 = vsyncpa %s8, 0
    %10 = vsyncpa [#allocation4], 0
    %s11 = scalar_lea.sflag [#allocation4], 1
    %12 = vsyncpa %s11, 0
    loop: start=0, step=1, limit=4
    $region2: #{tpu_custom_call.1} parent=1 // loop_pre_header
      _
    $region3: #{tpu_custom_call.1} parent=1 // loop_header
      %s14 = sphi 0, %s18
      %p15 = scmp.ge.s32.totalorder %s14, 4
      %s21 = sphi 0, %s33
      %s22 = sphi 0, %s29
      %s23 = sphi 0, %s21
      %s24 = sphi 0, %s22
      %s25 = sphi 0, %s23
      %s26 = sphi 0, %s24
      %s36 = sphi 0, %s38
      %s39 = sphi 0, %s36
      %s40 = sphi 0, %s39
      %s56 = sphi 0, %s40
      %s64 = sphi 0, %s66
      %s67 = sphi 0, %s64
      %s68 = sphi 0, %s67
      %s84 = sphi 0, %s68
      %s92 = sphi 0, %s94
      %s95 = sphi 0, %s92
      %s96 = sphi 0, %s95
      %s112 = sphi 0, %s96
    $region4: #{tpu_custom_call.1} parent=1 // loop_header_branch
      %17 = sbr.rel (%p15) target = $region8
    $region5: #{tpu_custom_call.1} parent=1 // loop_body
      %s19 = ssub.s32 %s14, 1
      %s20 = ssub.s32 %s14, 2
      %s27 = sadd.s32 1, %s22
      %p28 = scmp.ge.s32.totalorder %s27, 2
      %s29 = scalar_select %p28, 0, %s27
      %s30 = sadd.s32 1, %s21
      %s31 = scalar_select %p28, %s30, %s21
      %p32 = scmp.ge.s32.totalorder %s31, 1
      %s33 = scalar_select %p32, 0, %s31
      %s34 = ssub.s32 %s21, %s33
      %p35 = scmp.eq.s32.totalorder %s34, 0
      %s37 = sadd.s32 %s36, 1
      %s38 = scalar_select %p35, %s36, %s37
      %p41 = pneg %p35
      %p42 = scmp.eq.s32.totalorder %s14, 1
      %p43 = por %p41, %p42
      %p44 = scmp.ne.s32.totalorder %s36, %s39
      %p45 = scmp.eq.s32.totalorder %s14, 0
      %p46 = por %p44, %p45
      %p47 = scmp.ne.s32.totalorder %s36, %s39
      %p48 = scmp.eq.s32.totalorder %s19, 1
      %p49 = por %p47, %p48
      %p50 = scmp.ne.s32.totalorder %s39, %s40
      %p51 = scmp.eq.s32.totalorder %s19, 0
      %p52 = por %p50, %p51
      %p53 = scmp.ne.s32.totalorder %s39, %s40
      %p54 = scmp.eq.s32.totalorder %s20, 1
      %p55 = por %p53, %p54
      %p57 = scmp.ne.s32.totalorder %s40, %s56
      %p58 = scmp.eq.s32.totalorder %s20, 0
      %p59 = por %p57, %p58
      %s60 = ssub.s32 %s21, %s33
      %s61 = ssub.s32 %s22, %s29
      %s62 = sor.u32 %s60, %s61
      %p63 = scmp.eq.s32.totalorder %s62, 0
      %s65 = sadd.s32 %s64, 1
      %s66 = scalar_select %p63, %s64, %s65
      %p69 = pneg %p63
      %p70 = scmp.eq.s32.totalorder %s14, 1
      %p71 = por %p69, %p70
      %p72 = scmp.ne.s32.totalorder %s64, %s67
      %p73 = scmp.eq.s32.totalorder %s14, 0
      %p74 = por %p72, %p73
      %p75 = scmp.ne.s32.totalorder %s64, %s67
      %p76 = scmp.eq.s32.totalorder %s19, 1
      %p77 = por %p75, %p76
      %p78 = scmp.ne.s32.totalorder %s67, %s68
      %p79 = scmp.eq.s32.totalorder %s19, 0
      %p80 = por %p78, %p79
      %p81 = scmp.ne.s32.totalorder %s67, %s68
      %p82 = scmp.eq.s32.totalorder %s20, 1
      %p83 = por %p81, %p82
      %p85 = scmp.ne.s32.totalorder %s68, %s84
      %p86 = scmp.eq.s32.totalorder %s20, 0
      %p87 = por %p85, %p86
      %s88 = ssub.s32 %s21, %s33
      %s89 = ssub.s32 %s22, %s29
      %s90 = sor.u32 %s88, %s89
      %p91 = scmp.eq.s32.totalorder %s90, 0
      %s93 = sadd.s32 %s92, 1
      %s94 = scalar_select %p91, %s92, %s93
      %p97 = pneg %p91
      %p98 = scmp.eq.s32.totalorder %s14, 1
      %p99 = por %p97, %p98
      %p100 = scmp.ne.s32.totalorder %s92, %s95
      %p101 = scmp.eq.s32.totalorder %s14, 0
      %p102 = por %p100, %p101
      %p103 = scmp.ne.s32.totalorder %s92, %s95
      %p104 = scmp.eq.s32.totalorder %s19, 1
      %p105 = por %p103, %p104
      %p106 = scmp.ne.s32.totalorder %s95, %s96
      %p107 = scmp.eq.s32.totalorder %s19, 0
      %p108 = por %p106, %p107
      %p109 = scmp.ne.s32.totalorder %s95, %s96
      %p110 = scmp.eq.s32.totalorder %s20, 1
      %p111 = por %p109, %p110
      %p113 = scmp.ne.s32.totalorder %s96, %s112
      %p114 = scmp.eq.s32.totalorder %s20, 0
      %p115 = por %p113, %p114
      %p116 = scmp.le.s32.totalorder 1, %s14
      %p117 = scmp.lt.s32.totalorder %s14, 3
      %p118 = pnand %p116, %p117
      %p119 = pneg %p118
      // Predicated region
      $region9: #{tpu_custom_call.1} parent=5 // pred_check
        _
      $region10: #{tpu_custom_call.1} parent=5 // pred_check_branch
        %121 = sbr.rel (%p118) target = $region12
      $region11: #{tpu_custom_call.1} parent=5 // pred_region
        %s122 = ssub.s32 %s14, 1
        // Predicated region
        $region13: #{tpu_custom_call.1} parent=11 // pred_check
          %p123 = pneg %p52
        $region14: #{tpu_custom_call.1} parent=11 // pred_check_branch
          %125 = sbr.rel (%p123) target = $region16
        $region15: #{tpu_custom_call.1} parent=11 // pred_region
          %p126 = scmp.lt.s32.totalorder %s23, 0
          %s127 = scalar_select %p126, %s23, 0
          %s128 = smul.addr %s127, 2
          %s129 = scalar_lea.vmem %s0, %s128
        $region16: #{tpu_custom_call.1} parent=11 // pred_fallthru
          _
      $region12: #{tpu_custom_call.1} parent=5 // pred_fallthru
        _
      %p130 = scmp.lt.s32.totalorder %s14, 2
      // Predicated region
      $region17: #{tpu_custom_call.1} parent=5 // pred_check
        %p131 = pneg %p130
      $region18: #{tpu_custom_call.1} parent=5 // pred_check_branch
        %133 = sbr.rel (%p131) target = $region20
      $region19: #{tpu_custom_call.1} parent=5 // pred_region
        // Predicated region
        $region21: #{tpu_custom_call.1} parent=19 // pred_check
          %p134 = pneg %p74
        $region22: #{tpu_custom_call.1} parent=19 // pred_check_branch
          %136 = sbr.rel (%p134) target = $region24
        $region23: #{tpu_custom_call.1} parent=19 // pred_region
          %s137 = sand.u32 %s64, 1
          %s138 = scalar_lea.sflag [#allocation3], %s137
          %s139 = sand.u32 %s64, 1
          %s140 = smul.addr %s139, 8
          %s141 = scalar_lea.vmem [#allocation2], %s140
          %s142 = smul.u32 4, %s22
          %144 = vsyncadd %s138, 0
          %s145 = smul.addr %s21, 8
          %s146 = sadd.s32 %s142, %s145
          %s147 = smul.addr %s146, 2
          %s148 = scalar_lea.hbm %s1, %s147
          %s150 = sshll.u32 %s148, 4
          %s151 = int_to_ptr.hbm [resolvable:$true] %s150
          %s152 = sshll.u32 %s141, 4
          %s153 = int_to_ptr.vmem [resolvable:$true] %s152
          %155 = dma.hbm_to_vmem [thread:$0]  %s151, 128, %s153, %s138
        $region24: #{tpu_custom_call.1} parent=19 // pred_fallthru
          _
      $region20: #{tpu_custom_call.1} parent=5 // pred_fallthru
        _
      %p156 = scmp.le.s32.totalorder 1, %s14
      %p157 = scmp.lt.s32.totalorder %s14, 3
      %p158 = pnand %p156, %p157
      %p159 = pneg %p158
      // Predicated region
      $region25: #{tpu_custom_call.1} parent=5 // pred_check
        _
      $region26: #{tpu_custom_call.1} parent=5 // pred_check_branch
        %161 = sbr.rel (%p158) target = $region28
      $region27: #{tpu_custom_call.1} parent=5 // pred_region
        %s162 = ssub.s32 %s14, 1
        %s163 = sand.u32 %s67, 1
        %s164 = scalar_lea.sflag [#allocation3], %s163
        %s165 = sand.u32 %s67, 1
        %s166 = smul.addr %s165, 8
        %s167 = scalar_lea.vmem [#allocation2], %s166
        // Predicated region
        $region29: #{tpu_custom_call.1} parent=27 // pred_check
          %p168 = pneg %p80
        $region30: #{tpu_custom_call.1} parent=27 // pred_check_branch
          %170 = sbr.rel (%p168) target = $region32
        $region31: #{tpu_custom_call.1} parent=27 // pred_region
          %172 = dma.done %s164, 128
        $region32: #{tpu_custom_call.1} parent=27 // pred_fallthru
          _
        %p173 = scmp.lt.s32.totalorder %s23, 0
        %s174 = scalar_select %p173, %s23, 0
        %s175 = smul.addr %s174, 2
        %s176 = scalar_lea.vmem %s0, %s175
        %p177 = pneg %p52
        %p178 = pneg %p49
        %s179 = sand.u32 %s67, 1
        %s180 = scalar_lea.sflag [#allocation3], %s179
        %s181 = sand.u32 %s67, 1
        %s182 = smul.addr %s181, 8
        %s183 = scalar_lea.vmem [#allocation2], %s182
        %p184 = pneg %p80
        %p185 = pneg %p77
        %p186 = pneg %p108
        %p187 = pneg %p105
        %s188 = sand.u32 %s95, 1
        %s189 = scalar_lea.sflag [#allocation4], %s188
        %s190 = sand.u32 %s95, 1
        %s191 = smul.addr %s190, 8
        %s192 = scalar_lea.vmem [#allocation5], %s191
        %p193 = scmp.lt.s32.totalorder %s23, 0
        %s194 = scalar_select %p193, %s23, 0
        %s195 = smul.addr %s194, 2
        %s196 = scalar_lea.vmem %s0, %s195
        %s197 = smul.u32 4, %s24
        %s198 = smul.u32 4, %s24
        %v199 = vld [vmem:[%s167] sm:$0xff]
        %v200 = vld [vmem:[%s196] sm:$0x3]
        %202 = vset.pattern.permute.xlu0 0
        %203 = vperm.xlu0 %202, %v200
        %v204 = vpop.permute.xlu0 %203
        %v206 = vunpack.c.l.s4 269488144
        %v207 = vunpack.c.0.s8 %v206
        %v208 = vperm.slane %v204, %v207
        %v210 = vmul.f32 %v199, %v208
        %211 = vst [vmem:[%s192] sm:$0xff] %v210
        %s212 = sand.u32 %s95, 1
        %s213 = scalar_lea.sflag [#allocation4], %s212
        %s214 = sand.u32 %s95, 1
        %s215 = smul.addr %s214, 8
        %s216 = scalar_lea.vmem [#allocation5], %s215
        // Predicated region
        $region33: #{tpu_custom_call.1} parent=27 // pred_check
          %p217 = pneg %p105
        $region34: #{tpu_custom_call.1} parent=27 // pred_check_branch
          %219 = sbr.rel (%p217) target = $region36
        $region35: #{tpu_custom_call.1} parent=27 // pred_region
          %s220 = smul.u32 4, %s24
          %222 = vsyncadd %s213, 0
          %s223 = smul.addr %s23, 8
          %s224 = sadd.s32 %s220, %s223
          %s225 = smul.addr %s224, 2
          %s226 = scalar_lea.hbm %s2, %s225
          %s228 = sshll.u32 %s216, 4
          %s229 = int_to_ptr.vmem [resolvable:$true] %s228
          %s230 = sshll.u32 %s226, 4
          %s231 = int_to_ptr.hbm [resolvable:$true] %s230
          %233 = dma.vmem_to_hbm [thread:$0]  %s229, 128, %s231, %s213
        $region36: #{tpu_custom_call.1} parent=27 // pred_fallthru
          _
      $region28: #{tpu_custom_call.1} parent=5 // pred_fallthru
        _
      %p234 = scmp.le.s32.totalorder 2, %s14
      // Predicated region
      $region37: #{tpu_custom_call.1} parent=5 // pred_check
        %p235 = pneg %p234
      $region38: #{tpu_custom_call.1} parent=5 // pred_check_branch
        %237 = sbr.rel (%p235) target = $region40
      $region39: #{tpu_custom_call.1} parent=5 // pred_region
        %s238 = ssub.s32 %s14, 2
        // Predicated region
        $region41: #{tpu_custom_call.1} parent=39 // pred_check
          %p239 = pneg %p111
        $region42: #{tpu_custom_call.1} parent=39 // pred_check_branch
          %241 = sbr.rel (%p239) target = $region44
        $region43: #{tpu_custom_call.1} parent=39 // pred_region
          %s242 = sand.u32 %s96, 1
          %s243 = scalar_lea.sflag [#allocation4], %s242
          %s244 = sand.u32 %s96, 1
          %s245 = smul.addr %s244, 8
          %s246 = scalar_lea.vmem [#allocation5], %s245
          %248 = dma.done %s243, 128
        $region44: #{tpu_custom_call.1} parent=39 // pred_fallthru
          _
      $region40: #{tpu_custom_call.1} parent=5 // pred_fallthru
        _
    $region6: #{tpu_custom_call.1} parent=1 // loop_footer
      %s18 = sadd.s32 1, %s14
    $region7: #{tpu_custom_call.1} parent=1 // loop_footer_branch
      %13 = sbr.rel target = $region3
    $region8: #{tpu_custom_call.1} parent=1 // loop_exit
      _
    %249 = vsyncpa [#allocation3], 1
    %s250 = scalar_lea.sflag [#allocation3], 1
    %251 = vsyncpa %s250, 1
    %252 = vsyncpa [#allocation4], 1
    %s253 = scalar_lea.sflag [#allocation4], 1
    %254 = vsyncpa %s253, 1

</llo_original>
